<compile_context>
chip_gen: v5e
topology: v5e:2x2
jax: 0.10.0
libtpu: 0.0.40
codegen_flags: <defaults>
</compile_context>

<pallas_src>
import functools

import jax
import jax.numpy as jnp
from jax.experimental import pallas as pl
from jax.experimental.pallas import tpu as pltpu


def _flatten_dma_kernel(x_ref, o_ref, sem, *, n_chunks, rows_per_chunk):
    """Pure DMA-engine work: chunked HBM->HBM copy, no VMEM staging, no VPU ops."""
    copies = []
    for c in range(n_chunks):  # static, small (<= 8) unrolled chunk loop
        r0 = c * rows_per_chunk
        cp = pltpu.make_async_copy(
            x_ref.at[pl.ds(r0, rows_per_chunk), :],
            o_ref.at[pl.ds(r0, rows_per_chunk), :],
            sem.at[c],
        )
        cp.start()
        copies.append(cp)
    # Start all chunks first (multiple DMA engines in flight), then wait on all.
    for cp in copies:
        cp.wait()


def _num_dma_chunks(batch, total_bytes, *, max_chunks=8, min_chunk_bytes=1 << 20):
    """Number of equal row-chunks: keep each chunk >= ~1 MiB, at most `max_chunks`,
    and an exact divisor of `batch` so every DMA moves the same row count."""
    want = max(1, min(max_chunks, total_bytes // min_chunk_bytes))
    want = max(1, min(want, batch))
    while batch % want:
        want -= 1
    return want


def flatten(x):
    """Pallas equivalent of PyTorch Flatten: x of shape (B, ...) -> (B, prod(...))."""
    B = x.shape[0]
    D = 1
    for d in x.shape[1:]:
        D *= d

    # Row-major flatten of the trailing dims (same element order as torch .view on
    # a contiguous tensor).  The kernel below only adds the single HBM->HBM copy
    # needed to materialize the (B, D) output buffer.
    x2 = jnp.reshape(x, (B, D))

    total_bytes = B * D * jnp.dtype(x.dtype).itemsize
    n_chunks = _num_dma_chunks(B, total_bytes)
    rows_per_chunk = B // n_chunks

    kernel = functools.partial(
        _flatten_dma_kernel, n_chunks=n_chunks, rows_per_chunk=rows_per_chunk
    )

    return pl.pallas_call(
        kernel,
        out_shape=jax.ShapeDtypeStruct((B, D), x.dtype),
        in_specs=[pl.BlockSpec(memory_space=pl.ANY)],   # raw HBM ref, no auto-DMA
        out_specs=pl.BlockSpec(memory_space=pl.ANY),    # raw HBM ref, filled by DMA
        scratch_shapes=[pltpu.SemaphoreType.DMA((n_chunks,))],
    )(x2)


if __name__ == "__main__":
    key = jax.random.PRNGKey(0)

    # Small shapes consistent with a conv-net feature map feeding a Flatten:
    # batch=2, channels=4, spatial=16x16 -> flattened dim D = 1024.
    B, C, H, W = 2, 4, 16, 16
    x = jax.random.normal(key, (B, C, H, W), dtype=jnp.float32)

    y = jax.block_until_ready(flatten(x))
    y_ref = jnp.reshape(x, (B, C * H * W))
    assert y.shape == (B, C * H * W)
    assert y.dtype == x.dtype
    assert jnp.array_equal(y, y_ref), "mismatch vs reference flatten (f32)"

    # Same shape, bf16: the DMA path is dtype-agnostic (no sublane-packing tile math).
    xb = jax.random.normal(jax.random.PRNGKey(0), (B, C, H, W), dtype=jnp.bfloat16)
    yb = jax.block_until_ready(flatten(xb))
    assert yb.dtype == jnp.bfloat16
    assert jnp.array_equal(yb, jnp.reshape(xb, (B, C * H * W))), "mismatch (bf16)"

    print("KERNEL_OK")
</pallas_src>

<mosaic_0001>
module attributes {stable_mosaic.version = 11 : i64} {
  func.func @_flatten_dma_kernel(%arg0: memref<2x1024xf32, #tpu.memory_space<any>>, %arg1: memref<2x1024xf32, #tpu.memory_space<any>>, %arg2: memref<1x!tpu.dma_semaphore, #tpu.memory_space<semaphore_mem>>) attributes {dimension_semantics = [], scalar_prefetch = 0 : i64, scratch_operands = 1 : i64, tpu.core_type = #tpu.core_type<tc>} {
    %c0_i32 = arith.constant 0 : i32
    %c0_i32_0 = arith.constant 0 : i32
    %c0_i32_1 = arith.constant 0 : i32
    %0 = tpu.memref_slice %arg0[%c0_i32_0, %c0_i32_1] : memref<2x1024xf32, #tpu.memory_space<any>> -> memref<2x1024xf32, #tpu.memory_space<any>>
    %c0_i32_2 = arith.constant 0 : i32
    %c0_i32_3 = arith.constant 0 : i32
    %1 = tpu.memref_slice %arg1[%c0_i32_2, %c0_i32_3] : memref<2x1024xf32, #tpu.memory_space<any>> -> memref<2x1024xf32, #tpu.memory_space<any>>
    %2 = tpu.memref_slice %arg2[%c0_i32] : memref<1x!tpu.dma_semaphore, #tpu.memory_space<semaphore_mem>> -> memref<1x!tpu.dma_semaphore, #tpu.memory_space<semaphore_mem>>
    %3 = tpu.memref_squeeze %2 : memref<1x!tpu.dma_semaphore, #tpu.memory_space<semaphore_mem>> -> memref<!tpu.dma_semaphore, #tpu.memory_space<semaphore_mem>>
    tpu.enqueue_dma source(%0 : memref<2x1024xf32, #tpu.memory_space<any>>) target(%1 : memref<2x1024xf32, #tpu.memory_space<any>>) target_semaphore(%3 : memref<!tpu.dma_semaphore, #tpu.memory_space<semaphore_mem>>)
    %c0_i32_4 = arith.constant 0 : i32
    %c0_i32_5 = arith.constant 0 : i32
    %c0_i32_6 = arith.constant 0 : i32
    %4 = tpu.memref_slice %arg0[%c0_i32_5, %c0_i32_6] : memref<2x1024xf32, #tpu.memory_space<any>> -> memref<2x1024xf32, #tpu.memory_space<any>>
    %c0_i32_7 = arith.constant 0 : i32
    %c0_i32_8 = arith.constant 0 : i32
    %5 = tpu.memref_slice %arg1[%c0_i32_7, %c0_i32_8] : memref<2x1024xf32, #tpu.memory_space<any>> -> memref<2x1024xf32, #tpu.memory_space<any>>
    %6 = tpu.memref_slice %arg2[%c0_i32_4] : memref<1x!tpu.dma_semaphore, #tpu.memory_space<semaphore_mem>> -> memref<1x!tpu.dma_semaphore, #tpu.memory_space<semaphore_mem>>
    %7 = tpu.memref_squeeze %6 : memref<1x!tpu.dma_semaphore, #tpu.memory_space<semaphore_mem>> -> memref<!tpu.dma_semaphore, #tpu.memory_space<semaphore_mem>>
    tpu.wait_dma2 semaphore(%7 : memref<!tpu.dma_semaphore, #tpu.memory_space<semaphore_mem>>) src(%4 : memref<2x1024xf32, #tpu.memory_space<any>>) dst(%5 : memref<2x1024xf32, #tpu.memory_space<any>>)
    return
  }
}

</mosaic_0001>

<llo_original>
// kernel: tpu_custom_call.1
$region0: #{tpu_custom_call.1}
  #allocation0 [shape = 'u32[]', space=smem, size = 0x4, offset = 0x4, fixed_abs, tag = 'smem constant byte address 0x4 - core index']
  #allocation1 [shape = 'u32[72,128]{1,0:T(1,128)}', space=vmem, size = 0x9000, scoped, tag = 'internal scratch']
  #allocation2 [shape = 's32[1]{0}', space=sflag, size = 0x4, scoped, tag = 'scratch operand']
  #allocation3 [shape = 's32[]', space=sflag, size = 0x4, offset = 0, fixed_abs, tag = 'sflag constant byte address 0x0 - dummy sync flag']
  #allocation4 [shape = 'u32[0]{0}', space=smem, size = 0, offset = 0, fixed_abs, tag = 'smem constant byte address 0x0 - null']
  %s0 = inlined_call_operand.hbm [shape: f32[2,1024], index: 0, kind: input, shape index: {}]
  %s1 = inlined_call_operand.hbm [shape: f32[2,1024], index: 1, kind: output, shape index: {}]
  %s2 = sld [smem:[#allocation0]]
  $region2: #{tpu_custom_call.1} parent=0
    _
  %s4 = ssub.s32 1, %s2
  %s5 = scalar_select 0, %s4, %s2
  %s7 = sshll.u32 1, 14
  %s8 = sxor.u32 4294967295, %s7
  %s10 = sshll.u32 %s0, 4
  %s11 = int_to_ptr.hbm [resolvable:$true] %s10
  %s12 = sshll.u32 %s1, 4
  %s13 = int_to_ptr.hbm [resolvable:$true] %s12
  %16 = dma.general %s11, 256, %s13, [#allocation2], [#allocation3], [#allocation4], 0, 0
  %s17 = smul.u32 2, 1
  %s18 = smul.u32 %s17, 8
  %s19 = sshll.u32 %s18, 4
  %20 = dma.done [#allocation2], %s19
  %21 = vsyncmov [#allocation2]
  %s22 = vpop.sfrf %21
  %p23 = scmp.eq.s32.totalorder %s22, 0
  %p24 = pneg %p23
  %26 = shalt.err (%p24)

</llo_original>
